<compile_context>
chip_gen: v5e
topology: v5e:2x2
jax: 0.10.0
libtpu: 0.0.40
codegen_flags: <defaults>
</compile_context>

<pallas_src>
import functools

import jax
import jax.numpy as jnp
from jax.experimental import pallas as pl
from jax.experimental.pallas import tpu as pltpu

EPS = 1e-5  # torch.nn.InstanceNorm2d default eps


# ---------------------------------------------------------------------------
# Kernels
# ---------------------------------------------------------------------------
def adain_kernel(img_ref, fb_ref, out_ref):
    """Single-pass path: the full spatial extent of each row is VMEM resident.

    img_ref: (rblk, HW)  lane-dense spatial slab, one row per (b, c)
    fb_ref:  (rblk, 2)   packed [factor, bias] per row
    out_ref: (rblk, HW)
    """
    x = img_ref[...].astype(jnp.float32)                        # (rblk, HW)
    inv_n = jnp.float32(1.0 / x.shape[-1])

    # two-pass stats: mean first, then centered sum of squares (no cancellation)
    mean = jnp.sum(x, axis=-1, keepdims=True) * inv_n           # (rblk, 1)
    d = x - mean
    var = jnp.sum(d * d, axis=-1, keepdims=True) * inv_n
    inv_std = jax.lax.rsqrt(var + EPS)

    fb = fb_ref[...]                                            # (rblk, 2) f32
    # fold normalization + modulation into one fused affine:
    #   (x - mean) * inv_std * factor + bias  ==  x * scale + shift
    scale = fb[:, 0:1] * inv_std
    shift = fb[:, 1:2] - mean * scale

    # re-read the tile for the affine so a separate f32 copy of a sub-f32
    # input does not have to stay live across both passes
    y = img_ref[...].astype(jnp.float32)
    out_ref[...] = (y * scale + shift).astype(out_ref.dtype)    # lane-broadcast


def adain_stats_kernel(img_ref, fb_ref, ss_ref, s_acc, m2_acc, *, n_total):
    """Streaming path (large HW): grid = (row_blocks, hw_blocks), hw innermost.

    Accumulates per-row sum and centered M2 across hw tiles using Chan's
    parallel combine, then folds the style modulation into (scale, shift).
    """
    h = pl.program_id(1)

    @pl.when(h == 0)
    def _():
        s_acc[...] = jnp.zeros_like(s_acc)
        m2_acc[...] = jnp.zeros_like(m2_acc)

    x = img_ref[...].astype(jnp.float32)                        # (rblk, hwt)
    nj = jnp.float32(x.shape[-1])
    tile_sum = jnp.sum(x, axis=-1, keepdims=True)
    tile_mean = tile_sum * (1.0 / nj)
    dd = x - tile_mean
    tile_m2 = jnp.sum(dd * dd, axis=-1, keepdims=True)

    n_prev = h.astype(jnp.float32) * nj
    mean_prev = s_acc[...] / jnp.maximum(n_prev, 1.0)           # 0 on step 0
    delta = tile_mean - mean_prev
    m2_acc[...] += tile_m2 + delta * delta * (n_prev * nj / (n_prev + nj))
    s_acc[...] += tile_sum

    @pl.when(h == pl.num_programs(1) - 1)
    def _():
        inv_n = jnp.float32(1.0 / n_total)
        mean = s_acc[...] * inv_n
        var = jnp.maximum(m2_acc[...] * inv_n, 0.0)
        inv_std = jax.lax.rsqrt(var + EPS)
        fb = fb_ref[...]
        scale = fb[:, 0:1] * inv_std
        shift = fb[:, 1:2] - mean * scale
        ss_ref[...] = jnp.concatenate([scale, shift], axis=-1)  # (rblk, 2)


def adain_apply_kernel(img_ref, ss_ref, out_ref):
    """Streaming path, pass 2: apply the fused per-row affine."""
    x = img_ref[...].astype(jnp.float32)
    ss = ss_ref[...]
    out_ref[...] = (x * ss[:, 0:1] + ss[:, 1:2]).astype(out_ref.dtype)


# ---------------------------------------------------------------------------
# Tiling heuristics
# ---------------------------------------------------------------------------
def _vmem_capacity_bytes():
    try:
        return int(pltpu.get_tpu_info().vmem_capacity_bytes)
    except Exception:
        return 64 * 1024 * 1024  # conservative (v7x-sized) default


def _pick_row_block(R, max_rows):
    """Row block: R itself, or a multiple of 8 (sublane tiling) <= ~max_rows,
    preferring exact divisors of R."""
    if R <= max(max_rows, 8):
        return R
    cap = max(8, (max_rows // 8) * 8)
    for d in range(cap, 7, -8):
        if R % d == 0:
            return d
    return cap  # non-dividing: Pallas masks the partial last block


def _pick_hw_block(HW, budget_bytes):
    """HW block: a multiple of 128 (lane tiling) dividing HW, sized so an
    8-row f32 tile stays near the budget."""
    target = max(128, (budget_bytes // (8 * 4) // 128) * 128)
    divs = [d for d in range(128, HW, 128) if HW % d == 0]
    if not divs:
        # TODO(synk): HW has no multiple-of-128 divisor; whole-row blocks may
        # exceed VMEM for very large non-128-aligned images.
        return HW
    fitting = [d for d in divs if d <= target]
    return max(fitting) if fitting else min(divs)


# ---------------------------------------------------------------------------
# Forward wrapper
# ---------------------------------------------------------------------------
def adain_forward(image, style, weight, lin_bias, *, tile_budget_bytes=None):
    """image: (B, C, H, W); style: (B, n_in);
       weight: (2C, n_in) (PyTorch Linear layout); lin_bias: (2C,)."""
    B, C, H, W = image.shape
    HW = H * W
    R = B * C

    # --- style projection hoisted out of the kernel (one batched matmul) ---
    proj = (style.astype(jnp.float32) @ weight.T.astype(jnp.float32)
            + lin_bias.astype(jnp.float32))                     # (B, 2C)
    fb = jnp.stack([proj[:, :C], proj[:, C:]], axis=-1)         # (B, C, 2)
    fb = fb.reshape(R, 2)                                       # packed factor/bias

    # --- lane-dense per-(b,c)-row layout (free view on contiguous NCHW) ---
    img = image.reshape(R, HW)

    # --- VMEM budgeting (v5e/v6e: 128 MiB physical, v7x: 64 MiB per TC) ---
    vmem_cap = _vmem_capacity_bytes()
    vmem_limit = min(int(0.70 * vmem_cap), 96 * 1024 * 1024)
    if tile_budget_bytes is None:
        # working set ~= 2x double-buffered input + 2x output + f32 temporaries
        tile_budget_bytes = max(vmem_limit // 8, 1 << 20)

    row_bytes = HW * 4  # in-kernel f32 temporaries dominate sizing
    cparams_1d = pltpu.CompilerParams(dimension_semantics=("parallel",),
                                      vmem_limit_bytes=vmem_limit)

    if min(R, 8) * row_bytes <= tile_budget_bytes:
        # ------------- single-pass path: full spatial extent per tile -------
        rblk = _pick_row_block(R, max(1, tile_budget_bytes // row_bytes))
        # give v7x's two TensorCores / the DMA pipeline >= 4 steps if possible
        while ((R + rblk - 1) // rblk < 4 and rblk >= 16 and rblk % 16 == 0
               and R % (rblk // 2) == 0):
            rblk //= 2
        nr = (R + rblk - 1) // rblk

        out = pl.pallas_call(
            adain_kernel,
            out_shape=jax.ShapeDtypeStruct((R, HW), image.dtype),
            grid_spec=pltpu.PrefetchScalarGridSpec(
                num_scalar_prefetch=0,
                grid=(nr,),
                in_specs=[
                    pl.BlockSpec((rblk, HW), lambda r: (r, 0)),   # image rows
                    pl.BlockSpec((rblk, 2), lambda r: (r, 0)),    # [factor,bias]
                ],
                out_specs=pl.BlockSpec((rblk, HW), lambda r: (r, 0)),
            ),
            compiler_params=cparams_1d,
        )(img, fb)
    else:
        # ------------- streaming path: tile HW as well (large images) -------
        hwt = _pick_hw_block(HW, tile_budget_bytes)
        nh = HW // hwt                       # hwt is HW or an exact divisor
        rblk = _pick_row_block(R, max(8, tile_budget_bytes // (hwt * 4)))
        nr = (R + rblk - 1) // rblk

        stats = functools.partial(adain_stats_kernel, n_total=float(HW))
        ss = pl.pallas_call(
            stats,
            out_shape=jax.ShapeDtypeStruct((R, 2), jnp.float32),
            grid_spec=pltpu.PrefetchScalarGridSpec(
                num_scalar_prefetch=0,
                grid=(nr, nh),
                in_specs=[
                    pl.BlockSpec((rblk, hwt), lambda r, h: (r, h)),
                    pl.BlockSpec((rblk, 2), lambda r, h: (r, 0)),
                ],
                out_specs=pl.BlockSpec((rblk, 2), lambda r, h: (r, 0)),
                scratch_shapes=[pltpu.VMEM((rblk, 1), jnp.float32),
                                pltpu.VMEM((rblk, 1), jnp.float32)],
            ),
            compiler_params=pltpu.CompilerParams(
                dimension_semantics=("parallel", "arbitrary"),
                vmem_limit_bytes=vmem_limit),
        )(img, fb)

        out = pl.pallas_call(
            adain_apply_kernel,
            out_shape=jax.ShapeDtypeStruct((R, HW), image.dtype),
            grid_spec=pltpu.PrefetchScalarGridSpec(
                num_scalar_prefetch=0,
                grid=(nr, nh),
                in_specs=[
                    pl.BlockSpec((rblk, hwt), lambda r, h: (r, h)),
                    pl.BlockSpec((rblk, 2), lambda r, h: (r, 0)),
                ],
                out_specs=pl.BlockSpec((rblk, hwt), lambda r, h: (r, h)),
            ),
            compiler_params=pltpu.CompilerParams(
                dimension_semantics=("parallel", "parallel"),
                vmem_limit_bytes=vmem_limit),
        )(img, ss)

    return out.reshape(B, C, H, W)


# ---------------------------------------------------------------------------
# Pure-JAX reference mirroring the PyTorch forward
# ---------------------------------------------------------------------------
def adain_reference(image, style, weight, lin_bias):
    C = image.shape[1]
    proj = style @ weight.T + lin_bias                           # (B, 2C)
    factor, bias = proj[:, :C], proj[:, C:]
    mean = jnp.mean(image, axis=(2, 3), keepdims=True)
    var = jnp.mean(jnp.square(image - mean), axis=(2, 3), keepdims=True)
    normed = (image - mean) * jax.lax.rsqrt(var + EPS)
    return normed * factor[:, :, None, None] + bias[:, :, None, None]


if __name__ == "__main__":
    B, C, H, W = 2, 4, 16, 16
    n_in = 8

    key = jax.random.PRNGKey(0)
    k_img, k_style, k_w, k_b = jax.random.split(key, 4)

    image = jax.random.normal(k_img, (B, C, H, W), dtype=jnp.float32)
    style = jax.random.normal(k_style, (B, n_in), dtype=jnp.float32)

    # deterministic Linear(n_in, 2C) params, PyTorch-style uniform init
    bound = 1.0 / (n_in ** 0.5)
    weight = jax.random.uniform(k_w, (2 * C, n_in), jnp.float32, -bound, bound)
    lin_bias = jax.random.uniform(k_b, (2 * C,), jnp.float32, -bound, bound)

    ref = adain_reference(image, style, weight, lin_bias)

    # main (single-pass, whole-row) path
    out = jax.block_until_ready(adain_forward(image, style, weight, lin_bias))
    assert out.shape == (B, C, H, W)
    assert jnp.allclose(out, ref, atol=1e-4, rtol=1e-4), "single-pass path mismatch"

    # streaming (HW-tiled) fallback path, forced via a tiny tile budget
    out2 = jax.block_until_ready(
        adain_forward(image, style, weight, lin_bias, tile_budget_bytes=600))
    assert jnp.allclose(out2, ref, atol=1e-4, rtol=1e-4), "streaming path mismatch"

    print("KERNEL_OK")
</pallas_src>

<mosaic_0001>
module attributes {stable_mosaic.version = 11 : i64} {
  func.func @adain_kernel(%arg0: i32, %arg1: memref<8x256xf32, #tpu.memory_space<vmem>>, %arg2: memref<8x2xf32, #tpu.memory_space<vmem>>, %arg3: memref<8x256xf32, #tpu.memory_space<vmem>>) attributes {dimension_semantics = [#tpu.dimension_semantics<parallel>], iteration_bounds = array<i64: 1>, scalar_prefetch = 0 : i64, scratch_operands = 0 : i64, tpu.core_type = #tpu.core_type<tc>, window_params = [{transform_indices = @transform_0, window_bounds = array<i64: 8, 256>}, {transform_indices = @transform_1, window_bounds = array<i64: 8, 2>}, {transform_indices = @transform_2, window_bounds = array<i64: 8, 256>}]} {
    %c0 = arith.constant 0 : index
    %c0_0 = arith.constant 0 : index
    %0 = vector.load %arg1[%c0, %c0_0] : memref<8x256xf32, #tpu.memory_space<vmem>>, vector<8x256xf32>
    %cst = arith.constant dense<0.000000e+00> : vector<8xf32>
    %1 = vector.multi_reduction <add>, %0, %cst [1] : vector<8x256xf32> to vector<8xf32>
    %2 = vector.shape_cast %1 : vector<8xf32> to vector<8x1xf32>
    %cst_1 = arith.constant 3.906250e-03 : f32
    %3 = vector.broadcast %cst_1 : f32 to vector<8x1xf32>
    %4 = arith.mulf %2, %3 : vector<8x1xf32>
    %5 = vector.broadcast %4 : vector<8x1xf32> to vector<8x256xf32>
    %6 = arith.subf %0, %5 : vector<8x256xf32>
    %7 = arith.mulf %6, %6 : vector<8x256xf32>
    %cst_2 = arith.constant dense<0.000000e+00> : vector<8xf32>
    %8 = vector.multi_reduction <add>, %7, %cst_2 [1] : vector<8x256xf32> to vector<8xf32>
    %9 = vector.shape_cast %8 : vector<8xf32> to vector<8x1xf32>
    %cst_3 = arith.constant 3.906250e-03 : f32
    %10 = vector.broadcast %cst_3 : f32 to vector<8x1xf32>
    %11 = arith.mulf %9, %10 : vector<8x1xf32>
    %cst_4 = arith.constant 9.99999974E-6 : f32
    %12 = vector.broadcast %cst_4 : f32 to vector<8x1xf32>
    %13 = arith.addf %11, %12 : vector<8x1xf32>
    %14 = math.rsqrt %13 : vector<8x1xf32>
    %c0_5 = arith.constant 0 : index
    %c0_6 = arith.constant 0 : index
    %15 = vector.load %arg2[%c0_5, %c0_6] : memref<8x2xf32, #tpu.memory_space<vmem>>, vector<8x2xf32>
    %16 = vector.extract_strided_slice %15 {offsets = [0, 0], sizes = [8, 1], strides = [1, 1]} : vector<8x2xf32> to vector<8x1xf32>
    %17 = arith.mulf %16, %14 : vector<8x1xf32>
    %18 = vector.extract_strided_slice %15 {offsets = [0, 1], sizes = [8, 1], strides = [1, 1]} : vector<8x2xf32> to vector<8x1xf32>
    %19 = arith.mulf %4, %17 : vector<8x1xf32>
    %20 = arith.subf %18, %19 : vector<8x1xf32>
    %c0_7 = arith.constant 0 : index
    %c0_8 = arith.constant 0 : index
    %21 = vector.load %arg1[%c0_7, %c0_8] : memref<8x256xf32, #tpu.memory_space<vmem>>, vector<8x256xf32>
    %22 = vector.broadcast %17 : vector<8x1xf32> to vector<8x256xf32>
    %23 = arith.mulf %21, %22 : vector<8x256xf32>
    %24 = vector.broadcast %20 : vector<8x1xf32> to vector<8x256xf32>
    %25 = arith.addf %23, %24 : vector<8x256xf32>
    %c0_9 = arith.constant 0 : index
    %c0_10 = arith.constant 0 : index
    %26 = vector.load %arg3[%c0_9, %c0_10] : memref<8x256xf32, #tpu.memory_space<vmem>>, vector<8x256xf32>
    tpu.vector_store %arg3[%c0_9, %c0_10], %25 {strides = array<i32>} : memref<8x256xf32, #tpu.memory_space<vmem>>, vector<8x256xf32>,
    return
  }
  func.func @transform_0(%arg0: i32) -> (i32, i32) {
    %c0_i32 = arith.constant 0 : i32
    %c0_i32_0 = arith.constant 0 : i32
    return %arg0, %c0_i32 : i32, i32
  }
  func.func @transform_1(%arg0: i32) -> (i32, i32) {
    %c0_i32 = arith.constant 0 : i32
    %c0_i32_0 = arith.constant 0 : i32
    return %arg0, %c0_i32 : i32, i32
  }
  func.func @transform_2(%arg0: i32) -> (i32, i32) {
    %c0_i32 = arith.constant 0 : i32
    %c0_i32_0 = arith.constant 0 : i32
    return %arg0, %c0_i32 : i32, i32
  }
}

</mosaic_0001>

<llo_original>
// kernel: tpu_custom_call.1
$region0: #{tpu_custom_call.1}
  #allocation0 [shape = 'u32[]', space=smem, size = 0x4, offset = 0x4, fixed_abs, tag = 'smem constant byte address 0x4 - core index']
  #allocation1 [shape = 'u32[72,128]{1,0:T(1,128)}', space=vmem, size = 0x9000, scoped, tag = 'internal scratch']
  %s0 = inlined_call_operand.hbm [shape: f32[8,256], index: 0, kind: input, shape index: {}]
  %s1 = inlined_call_operand.vmem [shape: f32[8,2], index: 1, kind: input, shape index: {}]
  %s2 = inlined_call_operand.hbm [shape: f32[8,256], index: 2, kind: output, shape index: {}]
  %s3 = sld [smem:[#allocation0]]
  $region22: #{tpu_custom_call.1} parent=0
    _
  %s5 = ssub.s32 1, %s3
  %s6 = scalar_select 0, %s5, %s3
  $region1: #{tpu_custom_call.1} parent=0
    #allocation2 [shape = 'u8[8192]{0}', space=vmem, size = 0x2000, scoped, tag = 'input window, operand 0, single buffered']
    #allocation3 [shape = 's32[1]{0}', space=sflag, size = 0x4, scoped, tag = 'scoped memory for tpu_custom_call.1']
    #allocation4 [shape = 's32[1]{0}', space=sflag, size = 0x4, scoped, tag = 'scoped memory for tpu_custom_call.1']
    #allocation5 [shape = 'u8[8192]{0}', space=vmem, size = 0x2000, scoped, tag = 'output window, operand 0, single buffered']
    %7 = vsyncpa [#allocation3], 0
    %8 = vsyncpa [#allocation4], 0
    // Predicated region
    $region2: #{tpu_custom_call.1} parent=1 // pred_check
      _
    $region3: #{tpu_custom_call.1} parent=1 // pred_check_branch
      %10 = sbr.rel (0) target = $region5
    $region4: #{tpu_custom_call.1} parent=1 // pred_region
      %12 = vsyncadd [#allocation3], 0
      %s14 = sshll.u32 %s0, 4
      %s15 = int_to_ptr.hbm [resolvable:$true] %s14
      %s16 = sshll.u32 [#allocation2], 4
      %s17 = int_to_ptr.vmem [resolvable:$true] %s16
      %19 = dma.hbm_to_vmem [thread:$0]  %s15, 256, %s17, [#allocation3]
    $region5: #{tpu_custom_call.1} parent=1 // pred_fallthru
      _
    // Predicated region
    $region6: #{tpu_custom_call.1} parent=1 // pred_check
      _
    $region7: #{tpu_custom_call.1} parent=1 // pred_check_branch
      %21 = sbr.rel (0) target = $region9
    $region8: #{tpu_custom_call.1} parent=1 // pred_region
      _
    $region9: #{tpu_custom_call.1} parent=1 // pred_fallthru
      _
    // Predicated region
    $region10: #{tpu_custom_call.1} parent=1 // pred_check
      _
    $region11: #{tpu_custom_call.1} parent=1 // pred_check_branch
      %23 = sbr.rel (0) target = $region13
    $region12: #{tpu_custom_call.1} parent=1 // pred_region
      %25 = dma.done [#allocation3], 256
    $region13: #{tpu_custom_call.1} parent=1 // pred_fallthru
      _
    %v26 = vld [vmem:[#allocation2] sm:$0xff]
    %v27 = vld [vmem:[#allocation2 + $0x8] sm:$0xff]
    %v28 = vadd.f32 %v26, %v27
    %29 = vadd.xlane.f32.xlu0 %v28
    %v30 = vpop.xlane.xlu0 %29
    %v31 = vmul.f32 %v30, 0.00390625
    %v32 = vsub.f32 %v26, %v31
    %v33 = vsub.f32 %v27, %v31
    %v34 = vmul.f32 %v32, %v32
    %v35 = vmul.f32 %v33, %v33
    %v36 = vadd.f32 %v34, %v35
    %37 = vadd.xlane.f32.xlu0 %v36
    %v38 = vpop.xlane.xlu0 %37
    %v39 = vmul.f32 %v38, 0.00390625
    %v40 = vadd.f32 %v39, 1e-05
    %v41 = vrsqrt.pop %v40
    %v42 = vmul.f32 %v41, %v40
    %v43 = vmul.f32 %v42, %v41
    %v44 = vmul.f32 0.5, %v43
    %v45 = vsub.f32 1.5, %v44
    %v46 = vmul.f32 %v41, %v45
    %vm47 = vweird.f32 %v40
    %vm48 = vweird.f32 %v41
    %vm49 = vmor %vm47, %vm48
    %v50 = vsel %vm49, %v41, %v46
    %v51 = vld [vmem:[%s1] sm:$0xff]
    %v52 = vmul.f32 %v51, %v50
    %v53 = vmul.f32 %v31, %v52
    %55 = vrot.lane.b32.xlu0 %v53, 1
    %v56 = vpop.permute.xlu0 %55
    %v58 = vsub.f32 %v51, %v56
    %60 = vset.pattern.permute.xlu0 0
    %61 = vperm.xlu0 %60, %v52
    %v62 = vpop.permute.xlu0 %61
    %v64 = vmul.f32 %v26, %v62
    %v65 = vmul.f32 %v27, %v62
    %67 = vset.pattern.permute.xlu0 1
    %68 = vperm.xlu0 %67, %v58
    %v69 = vpop.permute.xlu0 %68
    %v71 = vadd.f32 %v64, %v69
    %v72 = vadd.f32 %v65, %v69
    %73 = vst [vmem:[#allocation5] sm:$0xff] %v71
    %74 = vst [vmem:[#allocation5 + $0x8] sm:$0xff] %v72
    // Predicated region
    $region14: #{tpu_custom_call.1} parent=1 // pred_check
      _
    $region15: #{tpu_custom_call.1} parent=1 // pred_check_branch
      %76 = sbr.rel (0) target = $region17
    $region16: #{tpu_custom_call.1} parent=1 // pred_region
      %78 = vsyncadd [#allocation4], 0
      %s80 = sshll.u32 [#allocation5], 4
      %s81 = int_to_ptr.vmem [resolvable:$true] %s80
      %s82 = sshll.u32 %s2, 4
      %s83 = int_to_ptr.hbm [resolvable:$true] %s82
      %85 = dma.vmem_to_hbm [thread:$0]  %s81, 256, %s83, [#allocation4]
    $region17: #{tpu_custom_call.1} parent=1 // pred_fallthru
      _
    // Predicated region
    $region18: #{tpu_custom_call.1} parent=1 // pred_check
      _
    $region19: #{tpu_custom_call.1} parent=1 // pred_check_branch
      %87 = sbr.rel (0) target = $region21
    $region20: #{tpu_custom_call.1} parent=1 // pred_region
      %89 = dma.done [#allocation4], 256
    $region21: #{tpu_custom_call.1} parent=1 // pred_fallthru
      _
    %90 = vsyncpa [#allocation3], 1
    %91 = vsyncpa [#allocation4], 1

</llo_original>
